<compile_context>
chip_gen: v7x
topology: tpu7x:2x2x1
jax: 0.10.0
libtpu: 0.0.40
codegen_flags: <defaults>
</compile_context>

<pallas_src>
import functools

import jax
import jax.numpy as jnp
from jax.experimental import pallas as pl
from jax.experimental.pallas import tpu as pltpu


def _landmark_head_kernel(x_ref, w_ref, b_ref, o_ref, *, compute_dtype):
    # x_ref: (Cin, thw)   -- lanes = spatial (lane-dense read)
    # w_ref: (Cout, Cin)  -- constant index_map, stays resident in VMEM
    # b_ref: (Cout, 1)
    # o_ref: (Cout, thw)  -- lane-dense store
    acc = jnp.dot(w_ref[...].astype(compute_dtype),
                  x_ref[...].astype(compute_dtype),
                  preferred_element_type=jnp.float32)
    o_ref[...] = (acc + b_ref[...]).astype(o_ref.dtype)


def _round_up(v, m):
    return -(-v // m) * m


def _pick_spatial_tile(hw, cin, *, dtype_bytes=4, target_bytes=4 << 20,
                       max_tile=4096, min_tiles_per_image=4):
    """Pick the lane (spatial) tile width.

    - multiple of 128 (or full extent when hw <= 128);
    - ~target_bytes of x per grid step (thw ~= target / (cin * dtype_bytes));
    - capped at max_tile lanes;
    - shrunk so each image contributes >= min_tiles_per_image grid steps, so
      the v7x 2-TC megacore sharding still has steady-state double buffering.
    No exact-divisor requirement: the caller uses cdiv() and lets Pallas mask
    the ragged last block (safe: no reduction along the lane axis).
    """
    if hw <= 128:
        return hw  # full-extent block is always legal
    thw = target_bytes // max(1, cin * dtype_bytes)
    thw = min(thw, max_tile, hw)
    thw = max(128, (thw // 128) * 128)
    n_tiles = -(-hw // thw)
    if n_tiles < min_tiles_per_image:
        thw = max(128, (hw // min_tiles_per_image // 128) * 128)
    return thw


def _estimate_vmem_bytes(cin, cout, thw, *, dtype_bytes=4, x_buffers=2):
    """Padded-layout VMEM estimate for the pipelined buffers of this kernel."""
    x_b = x_buffers * _round_up(cin, 8) * _round_up(thw, 128) * dtype_bytes
    o_b = 2 * _round_up(cout, 8) * _round_up(thw, 128) * dtype_bytes
    w_b = 2 * _round_up(cout, 8) * _round_up(cin, 128) * dtype_bytes
    b_b = 2 * _round_up(cout, 8) * 128 * dtype_bytes
    return x_b + o_b + w_b + b_b


def landmark_head_forward(x_nchw, weight, bias, *, num_anchors=3, f_size=5,
                          tile_target_bytes=4 << 20, max_tile=4096,
                          min_tiles_per_image=4, x_buffer_count=2,
                          use_bf16_matmul=True):
    """
    x_nchw : (N, Cin, H, W)  float32
    weight : (Cout, Cin)     float32   (1x1 conv kernel squeezed)
    bias   : (Cout,)         float32
    returns (N, H*W*num_anchors, f_size)  == conv1x1(x).permute(0,2,3,1).view(N,-1,f)
    """
    N, Cin, H, W = x_nchw.shape
    Cout = num_anchors * f_size
    assert weight.shape == (Cout, Cin), weight.shape
    assert bias.shape == (Cout,), bias.shape
    HW = H * W

    dtype_bytes = jnp.dtype(x_nchw.dtype).itemsize
    thw = _pick_spatial_tile(HW, Cin, dtype_bytes=dtype_bytes,
                             target_bytes=tile_target_bytes,
                             max_tile=max_tile,
                             min_tiles_per_image=min_tiles_per_image)
    n_spatial_tiles = pl.cdiv(HW, thw)  # ragged last tile handled by Pallas masking

    # Free (row-major) reshape: no data movement, no transpose of x.
    x3 = x_nchw.reshape(N, Cin, HW)
    b2d = bias.reshape(Cout, 1)

    # Explicit, computed scoped-VMEM limit (portable across v5e/v6e/v7x).
    vmem_limit = _estimate_vmem_bytes(Cin, Cout, thw, dtype_bytes=dtype_bytes,
                                      x_buffers=x_buffer_count) + (2 << 20)
    vmem_limit = int(min(max(vmem_limit, 16 << 20), 64 << 20))

    # Optional deeper pipelining on x (v7x tuning knob); default stays at 2.
    x_spec_kwargs = {}
    if x_buffer_count != 2:
        x_spec_kwargs["pipeline_mode"] = pl.Buffered(x_buffer_count)
    x_spec = pl.BlockSpec((None, Cin, thw), lambda n, j: (n, 0, j),
                          **x_spec_kwargs)

    compute_dtype = jnp.bfloat16 if use_bf16_matmul else x_nchw.dtype

    out_nc_hw = pl.pallas_call(
        functools.partial(_landmark_head_kernel, compute_dtype=compute_dtype),
        out_shape=jax.ShapeDtypeStruct((N, Cout, HW), x_nchw.dtype),
        grid_spec=pltpu.PrefetchScalarGridSpec(
            num_scalar_prefetch=0,
            grid=(N, n_spatial_tiles),
            in_specs=[
                x_spec,                                            # activation tile
                pl.BlockSpec((Cout, Cin), lambda n, j: (0, 0)),    # resident weight
                pl.BlockSpec((Cout, 1), lambda n, j: (0, 0)),      # resident bias
            ],
            out_specs=pl.BlockSpec((None, Cout, thw), lambda n, j: (n, 0, j)),
        ),
        compiler_params=pltpu.CompilerParams(
            dimension_semantics=("parallel", "parallel"),
            vmem_limit_bytes=vmem_limit),
    )(x3, weight, b2d)

    # TODO(synk): upstream wins (outside this module): feed x as bf16 from the
    # producing conv, and fuse the sibling ClassHead/BboxHead/LandmarkHead by
    # concatenating their weights along Cout so x is streamed from HBM once.

    # Tiny post-permute on the small (Cout=15) output only:
    # (N, Cout, HW) -> (N, HW, Cout) -> (N, HW*A, f)   (matches permute+view exactly)
    out = jnp.transpose(out_nc_hw, (0, 2, 1))
    return out.reshape(N, HW * num_anchors, f_size)


def _reference(x_nchw, weight, bias, num_anchors=3, f_size=5):
    # Pure-JAX reference of the PyTorch forward for verification.
    N, Cin, H, W = x_nchw.shape
    out = jnp.einsum("nchw,oc->nohw", x_nchw, weight,
                     precision=jax.lax.Precision.HIGHEST)
    out = out + bias[None, :, None, None]
    out = jnp.transpose(out, (0, 2, 3, 1))
    return out.reshape(N, -1, f_size)


if __name__ == "__main__":
    num_anchors, f_size = 3, 5
    Cout = num_anchors * f_size
    key = jax.random.PRNGKey(0)

    # 32x32 exercises the even-tiling path; 20x20 exercises the ragged last tile.
    for (N, Cin, H, W) in [(2, 64, 32, 32), (2, 64, 20, 20)]:
        kx, kw, kb = jax.random.split(jax.random.fold_in(key, H), 3)
        x = jax.random.normal(kx, (N, Cin, H, W), dtype=jnp.float32)
        weight = jax.random.normal(kw, (Cout, Cin), dtype=jnp.float32) * 0.05
        bias = jax.random.normal(kb, (Cout,), dtype=jnp.float32) * 0.05

        ref = _reference(x, weight, bias, num_anchors, f_size)

        # Exact-f32 MXU path: tight check against the PyTorch-equivalent reference.
        fwd32 = jax.jit(functools.partial(
            landmark_head_forward, num_anchors=num_anchors, f_size=f_size,
            use_bf16_matmul=False))
        out32 = jax.block_until_ready(fwd32(x, weight, bias))
        assert out32.shape == (N, H * W * num_anchors, f_size), out32.shape
        err32 = float(jnp.max(jnp.abs(out32 - ref)))
        assert jnp.allclose(out32, ref, atol=1e-3, rtol=1e-3), err32

        # bf16-operand MXU path (default / perf): looser tolerance (~bf16 eps).
        fwd16 = jax.jit(functools.partial(
            landmark_head_forward, num_anchors=num_anchors, f_size=f_size,
            use_bf16_matmul=True))
        out16 = jax.block_until_ready(fwd16(x, weight, bias))
        assert out16.shape == (N, H * W * num_anchors, f_size), out16.shape
        err16 = float(jnp.max(jnp.abs(out16 - ref)))
        assert jnp.allclose(out16, ref, atol=2e-2, rtol=2e-2), err16

    print("KERNEL_OK")
</pallas_src>

<mosaic_0001>
module attributes {stable_mosaic.version = 11 : i64} {
  func.func @_landmark_head_kernel(%arg0: i32, %arg1: i32, %arg2: memref<1x64x256xf32, #tpu.memory_space<vmem>>, %arg3: memref<15x64xf32, #tpu.memory_space<vmem>>, %arg4: memref<15x1xf32, #tpu.memory_space<vmem>>, %arg5: memref<1x15x256xf32, #tpu.memory_space<vmem>>) attributes {dimension_semantics = [#tpu.dimension_semantics<parallel>, #tpu.dimension_semantics<parallel>], iteration_bounds = array<i64: 2, 4>, scalar_prefetch = 0 : i64, scratch_operands = 0 : i64, tpu.core_type = #tpu.core_type<tc>, window_params = [{transform_indices = @transform_0, window_bounds = array<i64: 1, 64, 256>}, {pipeline_mode = #tpu.pipeline_mode<synchronous>, transform_indices = @transform_1, window_bounds = array<i64: 15, 64>}, {pipeline_mode = #tpu.pipeline_mode<synchronous>, transform_indices = @transform_2, window_bounds = array<i64: 15, 1>}, {transform_indices = @transform_3, window_bounds = array<i64: 1, 15, 256>}]} {
    %c0 = arith.constant 0 : index
    %c0_0 = arith.constant 0 : index
    %0 = vector.load %arg3[%c0, %c0_0] : memref<15x64xf32, #tpu.memory_space<vmem>>, vector<15x64xf32>
    %c0_1 = arith.constant 0 : index
    %c0_2 = arith.constant 0 : index
    %c0_3 = arith.constant 0 : index
    %1 = vector.load %arg2[%c0_1, %c0_2, %c0_3] : memref<1x64x256xf32, #tpu.memory_space<vmem>>, vector<1x64x256xf32>
    %2 = vector.shape_cast %1 : vector<1x64x256xf32> to vector<64x256xf32>
    %cst = arith.constant dense<0.000000e+00> : vector<15x256xf32>
    %3 = tpu.matmul %0, %2, %cst {dimension_numbers = #tpu.dot_dimension_numbers<[1], [0], [0], [1], [0, 0, 1, 1], [], []>} : vector<15x64xf32>, vector<64x256xf32>, vector<15x256xf32> -> vector<15x256xf32>
    %c0_4 = arith.constant 0 : index
    %c0_5 = arith.constant 0 : index
    %4 = vector.load %arg4[%c0_4, %c0_5] : memref<15x1xf32, #tpu.memory_space<vmem>>, vector<15x1xf32>
    %5 = vector.broadcast %4 : vector<15x1xf32> to vector<15x256xf32>
    %6 = arith.addf %3, %5 : vector<15x256xf32>
    %c0_6 = arith.constant 0 : index
    %c0_7 = arith.constant 0 : index
    %c0_8 = arith.constant 0 : index
    %7 = vector.load %arg5[%c0_6, %c0_7, %c0_8] : memref<1x15x256xf32, #tpu.memory_space<vmem>>, vector<1x15x256xf32>
    %8 = vector.shape_cast %7 : vector<1x15x256xf32> to vector<15x256xf32>
    %9 = vector.shape_cast %6 : vector<15x256xf32> to vector<1x15x256xf32>
    tpu.vector_store %arg5[%c0_6, %c0_7, %c0_8], %9 {strides = array<i32>} : memref<1x15x256xf32, #tpu.memory_space<vmem>>, vector<1x15x256xf32>,
    return
  }
  func.func @transform_0(%arg0: i32, %arg1: i32) -> (i32, i32, i32) {
    %c0_i32 = arith.constant 0 : i32
    %c0_i32_0 = arith.constant 0 : i32
    return %arg0, %c0_i32, %arg1 : i32, i32, i32
  }
  func.func @transform_1(%arg0: i32, %arg1: i32) -> (i32, i32) {
    %c0_i32 = arith.constant 0 : i32
    %c0_i32_0 = arith.constant 0 : i32
    %c0_i32_1 = arith.constant 0 : i32
    return %c0_i32, %c0_i32_0 : i32, i32
  }
  func.func @transform_2(%arg0: i32, %arg1: i32) -> (i32, i32) {
    %c0_i32 = arith.constant 0 : i32
    %c0_i32_0 = arith.constant 0 : i32
    %c0_i32_1 = arith.constant 0 : i32
    return %c0_i32, %c0_i32_0 : i32, i32
  }
  func.func @transform_3(%arg0: i32, %arg1: i32) -> (i32, i32, i32) {
    %c0_i32 = arith.constant 0 : i32
    %c0_i32_0 = arith.constant 0 : i32
    return %arg0, %c0_i32, %arg1 : i32, i32, i32
  }
}

</mosaic_0001>

<llo_original>
// kernel: landmark_head_forward.1
$region0: #{landmark_head_forward.1}
  #allocation0 [shape = 'u32[]', space=smem, size = 0x4, offset = 0x4, fixed_abs, tag = 'smem constant byte address 0x4 - core index']
  #allocation1 [shape = 'u32[144,128]{1,0:T(1,128)}', space=vmem, size = 0x12000, scoped, tag = 'internal scratch']
  %s0 = inlined_call_operand.vmem [shape: f32[2,64,1024], index: 0, kind: input, shape index: {}]
  %s1 = inlined_call_operand.hbm [shape: f32[15,64], index: 1, kind: input, shape index: {}]
  %s2 = inlined_call_operand.vmem [shape: f32[15,1], index: 2, kind: input, shape index: {}]
  %s3 = inlined_call_operand.vmem [shape: f32[2,15,1024], index: 3, kind: output, shape index: {}]
  %s4 = sld [smem:[#allocation0]]
  $region91: #{landmark_head_forward.1} parent=0
    _
  %s6 = ssub.s32 1, %s4
  %s7 = scalar_select 0, %s6, %s4
  $region1: #{landmark_head_forward.1} parent=0
    #allocation2 [shape = 'u8[131072]{0}', space=vmem, size = 0x20000, scoped, tag = 'input window, operand 0']
    #allocation3 [shape = 'u8[8192]{0}', space=vmem, size = 0x2000, scoped, tag = 'input window, operand 1, single buffered']
    #allocation4 [shape = 's32[2]{0}', space=sflag, size = 0x8, scoped, tag = 'scoped memory for landmark_head_forward.1']
    #allocation5 [shape = 'u8[32768]{0}', space=vmem, size = 0x8000, scoped, tag = 'output window, operand 0']
    %8 = vsyncpa [#allocation4], 0
    loop: start=0, step=1, limit=10
    $region2: #{landmark_head_forward.1} parent=1 // loop_pre_header
      _
    $region3: #{landmark_head_forward.1} parent=1 // loop_header
      %s10 = sphi 0, %s14
      %p11 = scmp.ge.s32.totalorder %s10, 10
      %s17 = sphi 0, %s29
      %s18 = sphi 0, %s25
      %s19 = sphi 0, %s17
      %s20 = sphi 0, %s18
      %s21 = sphi 0, %s19
      %s22 = sphi 0, %s20
      %s34 = sphi 0, %s36
      %s37 = sphi 0, %s34
      %s38 = sphi 0, %s37
      %s54 = sphi 0, %s38
      %s58 = sphi 0, %s58
      %s60 = sphi 0, %s58
      %s61 = sphi 0, %s60
      %s75 = sphi 0, %s61
      %s79 = sphi 0, %s79
      %s81 = sphi 0, %s79
      %s82 = sphi 0, %s81
      %s96 = sphi 0, %s82
      %s104 = sphi 0, %s106
      %s107 = sphi 0, %s104
      %s108 = sphi 0, %s107
      %s124 = sphi 0, %s108
    $region4: #{landmark_head_forward.1} parent=1 // loop_header_branch
      %13 = sbr.rel (%p11) target = $region8
    $region5: #{landmark_head_forward.1} parent=1 // loop_body
      %s15 = ssub.s32 %s10, 1
      %s16 = ssub.s32 %s10, 2
      %s23 = sadd.s32 1, %s18
      %p24 = scmp.ge.s32.totalorder %s23, 4
      %s25 = scalar_select %p24, 0, %s23
      %s26 = sadd.s32 1, %s17
      %s27 = scalar_select %p24, %s26, %s17
      %p28 = scmp.ge.s32.totalorder %s27, 2
      %s29 = scalar_select %p28, 0, %s27
      %s30 = ssub.s32 %s17, %s29
      %s31 = ssub.s32 %s18, %s25
      %s32 = sor.u32 %s30, %s31
      %p33 = scmp.eq.s32.totalorder %s32, 0
      %s35 = sadd.s32 %s34, 1
      %s36 = scalar_select %p33, %s34, %s35
      %p39 = pneg %p33
      %p40 = scmp.eq.s32.totalorder %s10, 7
      %p41 = por %p39, %p40
      %p42 = scmp.ne.s32.totalorder %s34, %s37
      %p43 = scmp.eq.s32.totalorder %s10, 0
      %p44 = por %p42, %p43
      %p45 = scmp.ne.s32.totalorder %s34, %s37
      %p46 = scmp.eq.s32.totalorder %s15, 7
      %p47 = por %p45, %p46
      %p48 = scmp.ne.s32.totalorder %s37, %s38
      %p49 = scmp.eq.s32.totalorder %s15, 0
      %p50 = por %p48, %p49
      %p51 = scmp.ne.s32.totalorder %s37, %s38
      %p52 = scmp.eq.s32.totalorder %s16, 7
      %p53 = por %p51, %p52
      %p55 = scmp.ne.s32.totalorder %s38, %s54
      %p56 = scmp.eq.s32.totalorder %s16, 0
      %p57 = por %p55, %p56
      %s59 = sadd.s32 %s58, 1
      %p62 = scmp.eq.s32.totalorder %s10, 7
      %p63 = scmp.ne.s32.totalorder %s58, %s60
      %p64 = scmp.eq.s32.totalorder %s10, 0
      %p65 = por %p63, %p64
      %p66 = scmp.ne.s32.totalorder %s58, %s60
      %p67 = scmp.eq.s32.totalorder %s15, 7
      %p68 = por %p66, %p67
      %p69 = scmp.ne.s32.totalorder %s60, %s61
      %p70 = scmp.eq.s32.totalorder %s15, 0
      %p71 = por %p69, %p70
      %p72 = scmp.ne.s32.totalorder %s60, %s61
      %p73 = scmp.eq.s32.totalorder %s16, 7
      %p74 = por %p72, %p73
      %p76 = scmp.ne.s32.totalorder %s61, %s75
      %p77 = scmp.eq.s32.totalorder %s16, 0
      %p78 = por %p76, %p77
      %s80 = sadd.s32 %s79, 1
      %p83 = scmp.eq.s32.totalorder %s10, 7
      %p84 = scmp.ne.s32.totalorder %s79, %s81
      %p85 = scmp.eq.s32.totalorder %s10, 0
      %p86 = por %p84, %p85
      %p87 = scmp.ne.s32.totalorder %s79, %s81
      %p88 = scmp.eq.s32.totalorder %s15, 7
      %p89 = por %p87, %p88
      %p90 = scmp.ne.s32.totalorder %s81, %s82
      %p91 = scmp.eq.s32.totalorder %s15, 0
      %p92 = por %p90, %p91
      %p93 = scmp.ne.s32.totalorder %s81, %s82
      %p94 = scmp.eq.s32.totalorder %s16, 7
      %p95 = por %p93, %p94
      %p97 = scmp.ne.s32.totalorder %s82, %s96
      %p98 = scmp.eq.s32.totalorder %s16, 0
      %p99 = por %p97, %p98
      %s100 = ssub.s32 %s17, %s29
      %s101 = ssub.s32 %s18, %s25
      %s102 = sor.u32 %s100, %s101
      %p103 = scmp.eq.s32.totalorder %s102, 0
      %s105 = sadd.s32 %s104, 1
      %s106 = scalar_select %p103, %s104, %s105
      %p109 = pneg %p103
      %p110 = scmp.eq.s32.totalorder %s10, 7
      %p111 = por %p109, %p110
      %p112 = scmp.ne.s32.totalorder %s104, %s107
      %p113 = scmp.eq.s32.totalorder %s10, 0
      %p114 = por %p112, %p113
      %p115 = scmp.ne.s32.totalorder %s104, %s107
      %p116 = scmp.eq.s32.totalorder %s15, 7
      %p117 = por %p115, %p116
      %p118 = scmp.ne.s32.totalorder %s107, %s108
      %p119 = scmp.eq.s32.totalorder %s15, 0
      %p120 = por %p118, %p119
      %p121 = scmp.ne.s32.totalorder %s107, %s108
      %p122 = scmp.eq.s32.totalorder %s16, 7
      %p123 = por %p121, %p122
      %p125 = scmp.ne.s32.totalorder %s108, %s124
      %p126 = scmp.eq.s32.totalorder %s16, 0
      %p127 = por %p125, %p126
      %p128 = scmp.le.s32.totalorder 1, %s10
      %p129 = scmp.lt.s32.totalorder %s10, 9
      %p130 = pnand %p128, %p129
      %p131 = pneg %p130
      // Predicated region
      $region9: #{landmark_head_forward.1} parent=5 // pred_check
        _
      $region10: #{landmark_head_forward.1} parent=5 // pred_check_branch
        %133 = sbr.rel (%p130) target = $region12
      $region11: #{landmark_head_forward.1} parent=5 // pred_region
        %s134 = ssub.s32 %s10, 1
        // Predicated region
        $region13: #{landmark_head_forward.1} parent=11 // pred_check
          %p135 = pneg %p71
        $region14: #{landmark_head_forward.1} parent=11 // pred_check_branch
          %137 = sbr.rel (%p135) target = $region16
        $region15: #{landmark_head_forward.1} parent=11 // pred_region
          %s139 = ssub.s32 256, 256
          %140 = vsyncadd [#allocation4], %s139
          %s141 = sshll.u32 [#allocation3], 4
          %s142 = int_to_ptr.vmem [resolvable:$true] %s141
          %147 = dma.hbm_to_vmem [thread:$0]  %s1, 256, %s142, [#allocation4], 128, 128, 8
        $region16: #{landmark_head_forward.1} parent=11 // pred_fallthru
          _
        // Predicated region
        $region17: #{landmark_head_forward.1} parent=11 // pred_check
          %p148 = pneg %p92
        $region18: #{landmark_head_forward.1} parent=11 // pred_check_branch
          %150 = sbr.rel (%p148) target = $region20
        $region19: #{landmark_head_forward.1} parent=11 // pred_region
          _
        $region20: #{landmark_head_forward.1} parent=11 // pred_fallthru
          _
      $region12: #{landmark_head_forward.1} parent=5 // pred_fallthru
        _
      %p151 = scmp.lt.s32.totalorder %s10, 8
      // Predicated region
      $region21: #{landmark_head_forward.1} parent=5 // pred_check
        %p152 = pneg %p151
      $region22: #{landmark_head_forward.1} parent=5 // pred_check_branch
        %154 = sbr.rel (%p152) target = $region24
      $region23: #{landmark_head_forward.1} parent=5 // pred_region
        // Predicated region
        $region25: #{landmark_head_forward.1} parent=23 // pred_check
          %p155 = pneg %p44
        $region26: #{landmark_head_forward.1} parent=23 // pred_check_branch
          %157 = sbr.rel (%p155) target = $region28
        $region27: #{landmark_head_forward.1} parent=23 // pred_region
          %s158 = sand.u32 %s34, 1
          %s159 = sand.u32 %s34, 1
          %s160 = smul.addr %s159, 128
          %s161 = scalar_lea.vmem [#allocation2], %s160
          %s162 = smul.u32 2, %s18
          %s163 = smul.addr %s17, 64
          %s164 = sadd.s32 %s162, %s163
          %s165 = smul.addr %s164, 8
          %s166 = scalar_lea.vmem %s0, %s165
          // Predicated region
          $region29: #{landmark_head_forward.1} parent=27 // pred_check
            _
          $region30: #{landmark_head_forward.1} parent=27 // pred_check_branch
            %168 = sbr.rel (0) target = $region32
          $region31: #{landmark_head_forward.1} parent=27 // pred_region
            // Predicated region
            $region33: #{landmark_head_forward.1} parent=31 // pred_check
              _
            $region34: #{landmark_head_forward.1} parent=31 // pred_check_branch
              %170 = sbr.rel (0) target = $region36
            $region35: #{landmark_head_forward.1} parent=31 // pred_region
              loop: start=0, step=1, limit=1
              $region37: #{landmark_head_forward.1} parent=35 // loop_pre_header
                _
              $region38: #{landmark_head_forward.1} parent=35 // loop_header
                %s172 = sphi 0, %s176
                %p173 = scmp.ge.s32.totalorder %s172, 1
                %s177 = sphi %s166, %s166
                %s178 = sphi %s161, %s161
              $region39: #{landmark_head_forward.1} parent=35 // loop_header_branch
                %175 = sbr.rel (%p173) target = $region43
              $region40: #{landmark_head_forward.1} parent=35 // loop_body
                %v179 = vld [vmem:[%s177] sm:$0xff]
                %180 = vst [vmem:[%s178] sm:$0xff] %v179
                %v181 = vld [vmem:[%s177 + $0x8] sm:$0xff]
                %182 = vst [vmem:[%s178 + $0x8] sm:$0xff] %v181
                %v183 = vld [vmem:[%s177 + $0x40] sm:$0xff]
                %184 = vst [vmem:[%s178 + $0x10] sm:$0xff] %v183
                %v185 = vld [vmem:[%s177 + $0x48] sm:$0xff]
                %186 = vst [vmem:[%s178 + $0x18] sm:$0xff] %v185
                %v187 = vld [vmem:[%s177 + $0x80] sm:$0xff]
                %188 = vst [vmem:[%s178 + $0x20] sm:$0xff] %v187
                %v189 = vld [vmem:[%s177 + $0x88] sm:$0xff]
                %190 = vst [vmem:[%s178 + $0x28] sm:$0xff] %v189
                %v191 = vld [vmem:[%s177 + $0xc0] sm:$0xff]
                %192 = vst [vmem:[%s178 + $0x30] sm:$0xff] %v191
                %v193 = vld [vmem:[%s177 + $0xc8] sm:$0xff]
                %194 = vst [vmem:[%s178 + $0x38] sm:$0xff] %v193
                %v195 = vld [vmem:[%s177 + $0x100] sm:$0xff]
                %196 = vst [vmem:[%s178 + $0x40] sm:$0xff] %v195
                %v197 = vld [vmem:[%s177 + $0x108] sm:$0xff]
                %198 = vst [vmem:[%s178 + $0x48] sm:$0xff] %v197
                %v199 = vld [vmem:[%s177 + $0x140] sm:$0xff]
                %200 = vst [vmem:[%s178 + $0x50] sm:$0xff] %v199
                %v201 = vld [vmem:[%s177 + $0x148] sm:$0xff]
                %202 = vst [vmem:[%s178 + $0x58] sm:$0xff] %v201
                %v203 = vld [vmem:[%s177 + $0x180] sm:$0xff]
                %204 = vst [vmem:[%s178 + $0x60] sm:$0xff] %v203
                %v205 = vld [vmem:[%s177 + $0x188] sm:$0xff]
                %206 = vst [vmem:[%s178 + $0x68] sm:$0xff] %v205
                %v207 = vld [vmem:[%s177 + $0x1c0] sm:$0xff]
                %208 = vst [vmem:[%s178 + $0x70] sm:$0xff] %v207
                %v209 = vld [vmem:[%s177 + $0x1c8] sm:$0xff]
                %210 = vst [vmem:[%s178 + $0x78] sm:$0xff] %v209
              $region41: #{landmark_head_forward.1} parent=35 // loop_footer
                %s176 = sadd.s32 1, %s172
              $region42: #{landmark_head_forward.1} parent=35 // loop_footer_branch
                %171 = sbr.rel target = $region38
              $region43: #{landmark_head_forward.1} parent=35 // loop_exit
                _
            $region36: #{landmark_head_forward.1} parent=31 // pred_fallthru
              _
            // Predicated region
            $region44: #{landmark_head_forward.1} parent=31 // pred_check
              _
            $region45: #{landmark_head_forward.1} parent=31 // pred_check_branch
              %212 = sbr.rel target = $region47
            $region46: #{landmark_head_forward.1} parent=31 // pred_region
              _
            $region47: #{landmark_head_forward.1} parent=31 // pred_fallthru
              _
          $region32: #{landmark_head_forward.1} parent=27 // pred_fallthru
            _
          %213 = vnop
        $region28: #{landmark_head_forward.1} parent=23 // pred_fallthru
          _
      $region24: #{landmark_head_forward.1} parent=5 // pred_fallthru
        _
      %p214 = scmp.le.s32.totalorder 1, %s10
      %p215 = scmp.lt.s32.totalorder %s10, 9
      %p216 = pnand %p214, %p215
      %p217 = pneg %p216
      // Predicated region
      $region48: #{landmark_head_forward.1} parent=5 // pred_check
        _
      $region49: #{landmark_head_forward.1} parent=5 // pred_check_branch
        %219 = sbr.rel (%p216) target = $region51
      $region50: #{landmark_head_forward.1} parent=5 // pred_region
        %s220 = ssub.s32 %s10, 1
        %s221 = sand.u32 %s37, 1
        %s222 = sand.u32 %s37, 1
        %s223 = smul.addr %s222, 128
        %s224 = scalar_lea.vmem [#allocation2], %s223
        // Predicated region
        $region52: #{landmark_head_forward.1} parent=50 // pred_check
          %p225 = pneg %p50
        $region53: #{landmark_head_forward.1} parent=50 // pred_check_branch
          %227 = sbr.rel (%p225) target = $region55
        $region54: #{landmark_head_forward.1} parent=50 // pred_region
          _
        $region55: #{landmark_head_forward.1} parent=50 // pred_fallthru
          _
        // Predicated region
        $region56: #{landmark_head_forward.1} parent=50 // pred_check
          %p228 = pneg %p71
        $region57: #{landmark_head_forward.1} parent=50 // pred_check_branch
          %230 = sbr.rel (%p228) target = $region59
        $region58: #{landmark_head_forward.1} parent=50 // pred_region
          %231 = dma.done [#allocation4], 256
        $region59: #{landmark_head_forward.1} parent=50 // pred_fallthru
          _
        %s232 = sand.u32 %s37, 1
        %s233 = sand.u32 %s37, 1
        %s234 = smul.addr %s233, 128
        %s235 = scalar_lea.vmem [#allocation2], %s234
        %p236 = pneg %p50
        %p237 = pneg %p47
        %p238 = pneg %p71
        %p239 = pneg %p68
        %p240 = pneg %p92
        %p241 = pneg %p89
        %p242 = pneg %p120
        %p243 = pneg %p117
        %s244 = sand.u32 %s107, 1
        %s245 = sand.u32 %s107, 1
        %s246 = smul.addr %s245, 32
        %s247 = scalar_lea.vmem [#allocation5], %s246
        %s248 = smul.u32 2, %s20
        %s249 = smul.u32 2, %s20
        %v250 = vld [vmem:[#allocation3] sm:$0xff]
        %v251 = vld [vmem:[#allocation3 + $0x8] sm:$0x7f]
        %v252 = vld [vmem:[%s224] sm:$0xff]
        %v253 = vld [vmem:[%s224 + $0x8] sm:$0xff]
        %v254 = vld [vmem:[%s224 + $0x10] sm:$0xff]
        %v255 = vld [vmem:[%s224 + $0x18] sm:$0xff]
        %v256 = vld [vmem:[%s224 + $0x20] sm:$0xff]
        %v257 = vld [vmem:[%s224 + $0x28] sm:$0xff]
        %v258 = vld [vmem:[%s224 + $0x30] sm:$0xff]
        %v259 = vld [vmem:[%s224 + $0x38] sm:$0xff]
        %v260 = vld [vmem:[%s224 + $0x40] sm:$0xff]
        %v261 = vld [vmem:[%s224 + $0x48] sm:$0xff]
        %v262 = vld [vmem:[%s224 + $0x50] sm:$0xff]
        %v263 = vld [vmem:[%s224 + $0x58] sm:$0xff]
        %v264 = vld [vmem:[%s224 + $0x60] sm:$0xff]
        %v265 = vld [vmem:[%s224 + $0x68] sm:$0xff]
        %v266 = vld [vmem:[%s224 + $0x70] sm:$0xff]
        %v267 = vld [vmem:[%s224 + $0x78] sm:$0xff]
        %v268 = vld [vmem:[%s2] sm:$0xff]
        %v269 = vld [vmem:[%s2 + $0x8] sm:$0x7f]
        %271 = vset.pattern.permute.xlu0 0
        %272 = vperm.xlu0 %271, %v268
        %v273 = vpop.permute.xlu0 %272
        %276 = vset.pattern.permute.xlu0 0
        %277 = vperm.xlu0 %276, %v269
        %v278 = vpop.permute.xlu0 %277
        %vm280 = vcmask 523264
        %v282 = vsel %vm280, %v250, 0
        %v285 = vsel %vm280, %v251, 0
        %287 = vmatprep.subr.mxu0 %v253
        %288 = vmatpush1.msra.mxu0 %v252
        %289 = vmatprep.subr.mxu0 %v255
        %290 = vmatpush1.msra.mxu0 %v254
        %291 = vmatprep.subr.mxu0 %v257
        %292 = vmatpush1.msra.mxu0 %v256
        %293 = vmatprep.subr.mxu0 %v259
        %294 = vmatpush1.msra.mxu0 %v258
        %295 = vmatprep.subr.mxu0 %v261
        %296 = vmatpush1.msra.mxu0 %v260
        %297 = vmatprep.subr.mxu0 %v263
        %298 = vmatpush1.msra.mxu0 %v262
        %299 = vmatprep.subr.mxu0 %v265
        %300 = vmatpush1.msra.mxu0 %v264
        %301 = vmatprep.subr.mxu0 %v267
        %302 = vmatpush1.msra.mxu0 %v266
        %303 = vmatprep.subr.mxu0 0.0
        %304 = vmatpush1.msra.mxu0 0.0
        %305 = vmatprep.subr.mxu0 0.0
        %306 = vmatpush1.msra.mxu0 0.0
        %307 = vmatprep.subr.mxu0 0.0
        %308 = vmatpush1.msra.mxu0 0.0
        %309 = vmatprep.subr.mxu0 0.0
        %310 = vmatpush1.msra.mxu0 0.0
        %311 = vmatprep.subr.mxu0 0.0
        %312 = vmatpush1.msra.mxu0 0.0
        %313 = vmatprep.subr.mxu0 0.0
        %314 = vmatpush1.msra.mxu0 0.0
        %315 = vmatprep.subr.mxu0 0.0
        %316 = vmatpush1.msra.mxu0 0.0
        %317 = vmatprep.subr.mxu0 0.0
        %318 = vmatpush1.msra.mxu0 0.0
        %319 = vmatprep.subr.mxu0 0.0
        %320 = vmatpush1.msra.mxu0 0.0
        %321 = vmatprep.subr.mxu0 0.0
        %322 = vmatpush1.msra.mxu0 0.0
        %323 = vmatprep.subr.mxu0 0.0
        %324 = vmatpush1.msra.mxu0 0.0
        %325 = vmatprep.subr.mxu0 0.0
        %326 = vmatpush1.msra.mxu0 0.0
        %327 = vmatprep.subr.mxu0 0.0
        %328 = vmatpush1.msra.mxu0 0.0
        %329 = vmatprep.subr.mxu0 0.0
        %330 = vmatpush1.msra.mxu0 0.0
        %331 = vmatprep.subr.mxu0 0.0
        %332 = vmatpush1.msra.mxu0 0.0
        %333 = vmatprep.subr.mxu0 0.0
        %334 = vmatpush1.msra.mxu0 0.0
        %335 = vmatprep.subr.mxu0 0.0
        %336 = vmatpush1.msra.mxu0 0.0
        %337 = vmatprep.subr.mxu0 0.0
        %338 = vmatpush1.msra.mxu0 0.0
        %339 = vmatprep.subr.mxu0 0.0
        %340 = vmatpush1.msra.mxu0 0.0
        %341 = vmatprep.subr.mxu0 0.0
        %342 = vmatpush1.msra.mxu0 0.0
        %343 = vmatprep.subr.mxu0 0.0
        %344 = vmatpush1.msra.mxu0 0.0
        %345 = vmatprep.subr.mxu0 0.0
        %346 = vmatpush1.msra.mxu0 0.0
        %347 = vmatprep.subr.mxu0 0.0
        %348 = vmatpush1.msra.mxu0 0.0
        %349 = vmatprep.subr.mxu0 0.0
        %350 = vmatpush1.msra.mxu0 0.0
        %351 = vmatprep.mubr.f32.mxu0 0.0
        %352 = vmatmul.mubr.f32.gmra.mrb[0].mxu0 %v282
        %v353 = vpop.f32.mrb[0].mxu0
        %v354 = vadd.f32 %v273, %v353
        %v355 = vpop.f32.mrb[0].mxu0
        %v356 = vadd.f32 %v273, %v355
        %357 = vmatprep.mubr.f32.mxu0 0.0
        %358 = vmatmul.mubr.f32.gmra.mrb[0].mxu0 %v285
        %v359 = vpop.f32.mrb[0].mxu0
        %v360 = vadd.f32 %v278, %v359
        %v361 = vpop.f32.mrb[0].mxu0
        %v362 = vadd.f32 %v278, %v361
        %363 = vdwg.mxu0
        %364 = vst [vmem:[%s247] sm:$0xff] %v354
        %365 = vst [vmem:[%s247 + $0x8] sm:$0xff] %v356
        %366 = vst [vmem:[%s247 + $0x10] sm:$0x7f] %v360
        %367 = vst [vmem:[%s247 + $0x18] sm:$0x7f] %v362
        %s368 = sand.u32 %s107, 1
        %s369 = sand.u32 %s107, 1
        %s370 = smul.addr %s369, 32
        %s371 = scalar_lea.vmem [#allocation5], %s370
        // Predicated region
        $region60: #{landmark_head_forward.1} parent=50 // pred_check
          %p372 = pneg %p117
        $region61: #{landmark_head_forward.1} parent=50 // pred_check_branch
          %374 = sbr.rel (%p372) target = $region63
        $region62: #{landmark_head_forward.1} parent=50 // pred_region
          %s375 = smul.u32 2, %s20
          %s376 = smul.addr %s19, 16
          %s377 = sadd.s32 %s375, %s376
          %s378 = smul.addr %s377, 8
          %s379 = scalar_lea.vmem %s3, %s378
          // Predicated region
          $region64: #{landmark_head_forward.1} parent=62 // pred_check
            _
          $region65: #{landmark_head_forward.1} parent=62 // pred_check_branch
            %381 = sbr.rel (0) target = $region67
          $region66: #{landmark_head_forward.1} parent=62 // pred_region
            // Predicated region
            $region68: #{landmark_head_forward.1} parent=66 // pred_check
              _
            $region69: #{landmark_head_forward.1} parent=66 // pred_check_branch
              %383 = sbr.rel (0) target = $region71
            $region70: #{landmark_head_forward.1} parent=66 // pred_region
              loop: start=0, step=1, limit=1
              $region72: #{landmark_head_forward.1} parent=70 // loop_pre_header
                _
              $region73: #{landmark_head_forward.1} parent=70 // loop_header
                %s385 = sphi 0, %s389
                %p386 = scmp.ge.s32.totalorder %s385, 1
                %s390 = sphi %s371, %s371
                %s391 = sphi %s379, %s379
              $region74: #{landmark_head_forward.1} parent=70 // loop_header_branch
                %388 = sbr.rel (%p386) target = $region78
              $region75: #{landmark_head_forward.1} parent=70 // loop_body
                %v392 = vld [vmem:[%s390] sm:$0xff]
                %393 = vst [vmem:[%s391] sm:$0xff] %v392
                %v394 = vld [vmem:[%s390 + $0x8] sm:$0xff]
                %395 = vst [vmem:[%s391 + $0x8] sm:$0xff] %v394
                %v396 = vld [vmem:[%s390 + $0x10] sm:$0xff]
                %397 = vst [vmem:[%s391 + $0x40] sm:$0xff] %v396
                %v398 = vld [vmem:[%s390 + $0x18] sm:$0xff]
                %399 = vst [vmem:[%s391 + $0x48] sm:$0xff] %v398
              $region76: #{landmark_head_forward.1} parent=70 // loop_footer
                %s389 = sadd.s32 1, %s385
              $region77: #{landmark_head_forward.1} parent=70 // loop_footer_branch
                %384 = sbr.rel target = $region73
              $region78: #{landmark_head_forward.1} parent=70 // loop_exit
                _
            $region71: #{landmark_head_forward.1} parent=66 // pred_fallthru
              _
            // Predicated region
            $region79: #{landmark_head_forward.1} parent=66 // pred_check
              _
            $region80: #{landmark_head_forward.1} parent=66 // pred_check_branch
              %401 = sbr.rel target = $region82
            $region81: #{landmark_head_forward.1} parent=66 // pred_region
              _
            $region82: #{landmark_head_forward.1} parent=66 // pred_fallthru
              _
          $region67: #{landmark_head_forward.1} parent=62 // pred_fallthru
            _
          %402 = vnop
        $region63: #{landmark_head_forward.1} parent=50 // pred_fallthru
          _
      $region51: #{landmark_head_forward.1} parent=5 // pred_fallthru
        _
      %p403 = scmp.le.s32.totalorder 2, %s10
      // Predicated region
      $region83: #{landmark_head_forward.1} parent=5 // pred_check
        %p404 = pneg %p403
      $region84: #{landmark_head_forward.1} parent=5 // pred_check_branch
        %406 = sbr.rel (%p404) target = $region86
      $region85: #{landmark_head_forward.1} parent=5 // pred_region
        %s407 = ssub.s32 %s10, 2
        // Predicated region
        $region87: #{landmark_head_forward.1} parent=85 // pred_check
          %p408 = pneg %p123
        $region88: #{landmark_head_forward.1} parent=85 // pred_check_branch
          %410 = sbr.rel (%p408) target = $region90
        $region89: #{landmark_head_forward.1} parent=85 // pred_region
          %s411 = sand.u32 %s108, 1
          %s412 = sand.u32 %s108, 1
          %s413 = smul.addr %s412, 32
          %s414 = scalar_lea.vmem [#allocation5], %s413
        $region90: #{landmark_head_forward.1} parent=85 // pred_fallthru
          _
      $region86: #{landmark_head_forward.1} parent=5 // pred_fallthru
        _
    $region6: #{landmark_head_forward.1} parent=1 // loop_footer
      %s14 = sadd.s32 1, %s10
    $region7: #{landmark_head_forward.1} parent=1 // loop_footer_branch
      %9 = sbr.rel target = $region3
    $region8: #{landmark_head_forward.1} parent=1 // loop_exit
      _
    %415 = vsyncpa [#allocation4], 1
    %s416 = scalar_lea.sflag [#allocation4], 1
    %417 = vsyncpa %s416, 1

</llo_original>
